<compile_context>
chip_gen: v7x
topology: tpu7x:2x2x1
jax: 0.10.0
libtpu: 0.0.40
codegen_flags: <defaults>
</compile_context>

<pallas_src>
import jax
import jax.numpy as jnp
from jax import lax
from jax.experimental import pallas as pl
from jax.experimental.pallas import tpu as pltpu


def _round_up(x, m):
    return (x + m - 1) // m * m


# --------------------------------------------------------------------------
# Kernel
# --------------------------------------------------------------------------
def _make_mismatch_kernel(hw, lane_tile, num_k):
    """Per-(image,class)-row ss_loss over a (TM, lane_tile) slab.

    hw        : number of valid spatial elements per row (H*W).
    lane_tile : lane-block width TL (== hw when a row fits in one block).
    num_k     : number of lane blocks (extent of grid axis 1).
    """
    needs_lane_mask = (hw % lane_tile) != 0  # last lane block overhangs

    def kernel(net_ref, tgt_ref, pos_ref, out_ref, *acc_refs):
        k = pl.program_id(1)

        # Upcast in vregs; inputs stream from HBM in their native dtype.
        n = net_ref[...].astype(jnp.float32)
        t = tgt_ref[...].astype(jnp.float32)
        p = pos_ref[...].astype(jnp.float32)

        d = (t - n) * (t - n)
        omt = 1.0 - t            # (1 - target), direct (torch parity)
        dt = d * t
        dmt = d * omt

        if needs_lane_mask:
            lane = lax.broadcasted_iota(jnp.int32, t.shape, 1)
            valid = (k * lane_tile + lane) < hw
            part_st = jnp.sum(jnp.where(valid, t, 0.0), axis=-1, keepdims=True)
            part_sdt = jnp.sum(jnp.where(valid, dt, 0.0), axis=-1, keepdims=True)
            part_sdmt = jnp.sum(jnp.where(valid, dmt, 0.0), axis=-1, keepdims=True)
            part_somt = jnp.sum(jnp.where(valid, omt, 0.0), axis=-1, keepdims=True)
            part_mt = jnp.max(jnp.where(valid, t, -jnp.inf), axis=-1, keepdims=True)
            part_mp = jnp.max(jnp.where(valid, p, -jnp.inf), axis=-1, keepdims=True)
        else:
            part_st = jnp.sum(t, axis=-1, keepdims=True)
            part_sdt = jnp.sum(dt, axis=-1, keepdims=True)
            part_sdmt = jnp.sum(dmt, axis=-1, keepdims=True)
            part_somt = jnp.sum(omt, axis=-1, keepdims=True)
            part_mt = jnp.max(t, axis=-1, keepdims=True)
            part_mp = jnp.max(p, axis=-1, keepdims=True)

        def finalize(s_t, s_dt, s_dmt, s_omt, m_t, m_p):
            loss_1 = s_dt / (s_t + 1e-6)
            loss_2 = s_dmt / (s_omt + 1e-6)
            loss = 0.05 * loss_1 + 0.95 * loss_2
            # Skip condition of the PyTorch module: max(target)==0 AND
            # max(max_positiones)==0 -> that class contributes 0.
            skip = (m_t == 0.0) & (m_p == 0.0)
            out_ref[...] = jnp.where(skip, 0.0, loss).astype(out_ref.dtype)

        if num_k == 1:
            # Common path: whole row in one block, no scratch, no pl.when.
            finalize(part_st, part_sdt, part_sdmt, part_somt, part_mt, part_mp)
        else:
            s_t_ref, s_dt_ref, s_dmt_ref, s_omt_ref, m_t_ref, m_p_ref = acc_refs

            @pl.when(k == 0)
            def _():
                s_t_ref[...] = part_st
                s_dt_ref[...] = part_sdt
                s_dmt_ref[...] = part_sdmt
                s_omt_ref[...] = part_somt
                m_t_ref[...] = part_mt
                m_p_ref[...] = part_mp

            @pl.when(k > 0)
            def _():
                s_t_ref[...] += part_st
                s_dt_ref[...] += part_sdt
                s_dmt_ref[...] += part_sdmt
                s_omt_ref[...] += part_somt
                m_t_ref[...] = jnp.maximum(m_t_ref[...], part_mt)
                m_p_ref[...] = jnp.maximum(m_p_ref[...], part_mp)

            @pl.when(k == num_k - 1)
            def _():
                finalize(s_t_ref[...], s_dt_ref[...], s_dmt_ref[...],
                         s_omt_ref[...], m_t_ref[...], m_p_ref[...])

    return kernel


# --------------------------------------------------------------------------
# Tiling / VMEM sizing
# --------------------------------------------------------------------------
def _vmem_budgets():
    """Generation-aware VMEM budgets (input streaming budget, scoped limit)."""
    try:
        cap = int(pltpu.get_tpu_info().vmem_capacity_bytes)
    except Exception:
        cap = 64 * 1024 * 1024  # conservative: v7x has 64 MiB per TensorCore
    cap = max(cap, 16 * 1024 * 1024)
    input_budget = int(cap * 0.55)   # 3 inputs x 2 pipeline buffers live here
    vmem_limit = int(cap * 0.75)     # headroom for output blocks / scratch
    return input_budget, vmem_limit


def _choose_tiles(R, L, item_bytes, input_budget, lane_tile=None):
    """Pick (TM, TL, num_k) so 3 inputs x 2 pipeline buffers fit the budget.

    item_bytes = sum of the three inputs' element sizes (one "row column").
    """
    if lane_tile is None:
        row_bytes = 2 * L * item_bytes          # one full row, double-buffered
        max_tm_full = (input_budget // row_bytes) // 8 * 8
        if max_tm_full >= 8:
            # Path A: full rows, single lane block, 1-D parallel row grid.
            TM = min(max_tm_full, 2048, _round_up(R, 8))
            return TM, L, 1
        # Path B: rows too large for even an 8-row full-width slab -> K-split.
        TL = (input_budget // (2 * 8 * item_bytes)) // 128 * 128
        TL = max(128, min(TL, 64 * 1024, _round_up(L, 128)))
    else:
        # Forced lane tile (used for testing the K-split path).
        TL = max(128, _round_up(lane_tile, 128))

    num_k = pl.cdiv(L, TL)
    TM = (input_budget // (2 * TL * item_bytes)) // 8 * 8
    TM = max(8, min(TM, 256, _round_up(R, 8)))
    return TM, TL, num_k


# --------------------------------------------------------------------------
# Wrapper
# --------------------------------------------------------------------------
def _per_class_losses(net_out, target, max_positiones, lane_tile=None):
    B, C, H, W = net_out.shape
    R = B * C
    L = H * W

    # Reshape only (free for contiguous NCHW); no pad, no dtype cast — stream
    # inputs in their native (possibly narrow) dtype and upcast in-kernel.
    net_r = net_out.reshape(R, L)
    tgt_r = target.reshape(R, L)
    pos_r = max_positiones.reshape(R, L)

    item_bytes = sum(jnp.dtype(a.dtype).itemsize for a in (net_r, tgt_r, pos_r))
    input_budget, vmem_limit = _vmem_budgets()
    TM, TL, num_k = _choose_tiles(R, L, item_bytes, input_budget, lane_tile)

    in_spec = pl.BlockSpec((TM, TL), lambda i, k: (i, k))
    out_spec = pl.BlockSpec((TM, 1), lambda i, k: (i, 0))

    scratch = []
    if num_k > 1:
        # s_t, s_dt, s_dmt, s_omt, max_t, max_p partials across lane chunks.
        scratch = [pltpu.VMEM((TM, 1), jnp.float32) for _ in range(6)]

    cost = pl.CostEstimate(
        flops=int(12 * R * L),
        transcendentals=0,
        bytes_accessed=int(R * L * item_bytes + R * 4),
    )

    out = pl.pallas_call(
        _make_mismatch_kernel(L, TL, num_k),
        out_shape=jax.ShapeDtypeStruct((R, 1), jnp.float32),
        grid_spec=pltpu.PrefetchScalarGridSpec(
            num_scalar_prefetch=0,
            grid=(pl.cdiv(R, TM), num_k),
            in_specs=[in_spec, in_spec, in_spec],
            out_specs=out_spec,
            scratch_shapes=scratch,
        ),
        compiler_params=pltpu.CompilerParams(
            dimension_semantics=("parallel", "arbitrary"),
            vmem_limit_bytes=vmem_limit,
        ),
        cost_estimate=cost,
    )(net_r, tgt_r, pos_r)

    return out[:, 0].reshape(B, C)


def mismatch_loss(net_out, target, max_positiones, lane_tile=None):
    """Pallas-backed equivalent of Mismatch_loss.forward."""
    losses = _per_class_losses(net_out, target, max_positiones, lane_tile)  # (B, C)
    img_number = losses.shape[0]
    nonzero = jnp.count_nonzero(losses, axis=1).astype(jnp.float32)
    img_losses = jnp.sum(losses, axis=1) / nonzero   # matches torch 0/0 -> nan
    return jnp.sum(img_losses) / float(img_number)


# --------------------------------------------------------------------------
# Pure-numpy reference (mirrors the PyTorch loops)
# --------------------------------------------------------------------------
def _ref_mismatch_loss(net_out, target, max_positiones):
    import numpy as np
    net_out = np.asarray(net_out, dtype=np.float32)
    target = np.asarray(target, dtype=np.float32)
    max_positiones = np.asarray(max_positiones, dtype=np.float32)
    smooth = 1e-6
    B, C = target.shape[0], target.shape[1]
    img_losses = np.zeros(B, dtype=np.float32)
    for j in range(B):
        losses = np.zeros(C, dtype=np.float32)
        for i in range(C):
            if target[j, i].max() == 0 and max_positiones[j, i].max() == 0:
                continue
            d = (target[j, i] - net_out[j, i]) ** 2
            m1 = (d * target[j, i]).sum(); d1 = target[j, i].sum()
            m2 = (d * (1 - target[j, i])).sum(); d2 = (1 - target[j, i]).sum()
            losses[i] = 0.05 * (m1 / (d1 + smooth)) + 0.95 * (m2 / (d2 + smooth))
        img_losses[j] = losses.sum() / np.count_nonzero(losses)
    return img_losses.sum() / B


if __name__ == "__main__":
    import numpy as np

    key = jax.random.PRNGKey(0)

    def make_inputs(k, B, C, H, W):
        k1, k2, k3 = jax.random.split(k, 3)
        net = jax.random.uniform(k1, (B, C, H, W), dtype=jnp.float32)
        tgt = jax.random.bernoulli(k2, 0.3, (B, C, H, W)).astype(jnp.float32)
        pos = jax.random.bernoulli(k3, 0.3, (B, C, H, W)).astype(jnp.float32)
        # One fully inactive class (target==0 and max_positiones==0) to
        # exercise the skip ("continue") branch of the original module.
        tgt = tgt.at[0, 1].set(0.0)
        pos = pos.at[0, 1].set(0.0)
        return net, tgt, pos

    ka, kb = jax.random.split(key)

    # Case 1: common path — whole spatial row in one lane block.
    net, tgt, pos = make_inputs(ka, 2, 4, 16, 16)
    out = jax.block_until_ready(mismatch_loss(net, tgt, pos))
    ref = _ref_mismatch_loss(net, tgt, pos)
    np.testing.assert_allclose(np.asarray(out), ref, rtol=1e-4, atol=1e-6)

    # Case 2: forced K-split (lane_tile=128 on L=144, R=6) — exercises the
    # accumulator scratch path, the lane overhang mask, and row overhang.
    net2, tgt2, pos2 = make_inputs(kb, 2, 3, 12, 12)
    out2 = jax.block_until_ready(mismatch_loss(net2, tgt2, pos2, lane_tile=128))
    ref2 = _ref_mismatch_loss(net2, tgt2, pos2)
    np.testing.assert_allclose(np.asarray(out2), ref2, rtol=1e-4, atol=1e-6)

    print("KERNEL_OK")
</pallas_src>

<mosaic_0001>
module attributes {stable_mosaic.version = 11 : i64} {
  func.func @kernel(%arg0: i32, %arg1: i32, %arg2: memref<8x256xf32, #tpu.memory_space<vmem>>, %arg3: memref<8x256xf32, #tpu.memory_space<vmem>>, %arg4: memref<8x256xf32, #tpu.memory_space<vmem>>, %arg5: memref<8x1xf32, #tpu.memory_space<vmem>>) attributes {dimension_semantics = [#tpu.dimension_semantics<parallel>, #tpu.dimension_semantics<arbitrary>], iteration_bounds = array<i64: 1, 1>, scalar_prefetch = 0 : i64, scratch_operands = 0 : i64, tpu.core_type = #tpu.core_type<tc>, window_params = [{transform_indices = @transform_0, window_bounds = array<i64: 8, 256>}, {transform_indices = @transform_1, window_bounds = array<i64: 8, 256>}, {transform_indices = @transform_2, window_bounds = array<i64: 8, 256>}, {transform_indices = @transform_3, window_bounds = array<i64: 8, 1>}]} {
    %c0 = arith.constant 0 : index
    %c0_0 = arith.constant 0 : index
    %0 = vector.load %arg2[%c0, %c0_0] : memref<8x256xf32, #tpu.memory_space<vmem>>, vector<8x256xf32>
    %c0_1 = arith.constant 0 : index
    %c0_2 = arith.constant 0 : index
    %1 = vector.load %arg3[%c0_1, %c0_2] : memref<8x256xf32, #tpu.memory_space<vmem>>, vector<8x256xf32>
    %c0_3 = arith.constant 0 : index
    %c0_4 = arith.constant 0 : index
    %2 = vector.load %arg4[%c0_3, %c0_4] : memref<8x256xf32, #tpu.memory_space<vmem>>, vector<8x256xf32>
    %3 = arith.subf %1, %0 : vector<8x256xf32>
    %4 = arith.subf %1, %0 : vector<8x256xf32>
    %5 = arith.mulf %3, %4 : vector<8x256xf32>
    %cst = arith.constant 1.000000e+00 : f32
    %6 = vector.broadcast %cst : f32 to vector<8x256xf32>
    %7 = arith.subf %6, %1 : vector<8x256xf32>
    %8 = arith.mulf %5, %1 : vector<8x256xf32>
    %9 = arith.mulf %5, %7 : vector<8x256xf32>
    %cst_5 = arith.constant dense<0.000000e+00> : vector<8xf32>
    %10 = vector.multi_reduction <add>, %1, %cst_5 [1] : vector<8x256xf32> to vector<8xf32>
    %11 = vector.shape_cast %10 : vector<8xf32> to vector<8x1xf32>
    %cst_6 = arith.constant dense<0.000000e+00> : vector<8xf32>
    %12 = vector.multi_reduction <add>, %8, %cst_6 [1] : vector<8x256xf32> to vector<8xf32>
    %13 = vector.shape_cast %12 : vector<8xf32> to vector<8x1xf32>
    %cst_7 = arith.constant dense<0.000000e+00> : vector<8xf32>
    %14 = vector.multi_reduction <add>, %9, %cst_7 [1] : vector<8x256xf32> to vector<8xf32>
    %15 = vector.shape_cast %14 : vector<8xf32> to vector<8x1xf32>
    %cst_8 = arith.constant dense<0.000000e+00> : vector<8xf32>
    %16 = vector.multi_reduction <add>, %7, %cst_8 [1] : vector<8x256xf32> to vector<8xf32>
    %17 = vector.shape_cast %16 : vector<8xf32> to vector<8x1xf32>
    %cst_9 = arith.constant dense<0xFF800000> : vector<8xf32>
    %18 = vector.multi_reduction <maximumf>, %1, %cst_9 [1] : vector<8x256xf32> to vector<8xf32>
    %19 = vector.shape_cast %18 : vector<8xf32> to vector<8x1xf32>
    %cst_10 = arith.constant dense<0xFF800000> : vector<8xf32>
    %20 = vector.multi_reduction <maximumf>, %2, %cst_10 [1] : vector<8x256xf32> to vector<8xf32>
    %21 = vector.shape_cast %20 : vector<8xf32> to vector<8x1xf32>
    %cst_11 = arith.constant 9.99999997E-7 : f32
    %22 = vector.broadcast %cst_11 : f32 to vector<8x1xf32>
    %23 = arith.addf %11, %22 : vector<8x1xf32>
    %24 = arith.divf %13, %23 : vector<8x1xf32>
    %cst_12 = arith.constant 9.99999997E-7 : f32
    %25 = vector.broadcast %cst_12 : f32 to vector<8x1xf32>
    %26 = arith.addf %17, %25 : vector<8x1xf32>
    %27 = arith.divf %15, %26 : vector<8x1xf32>
    %cst_13 = arith.constant 5.000000e-02 : f32
    %28 = vector.broadcast %cst_13 : f32 to vector<8x1xf32>
    %29 = arith.mulf %28, %24 : vector<8x1xf32>
    %cst_14 = arith.constant 0.949999988 : f32
    %30 = vector.broadcast %cst_14 : f32 to vector<8x1xf32>
    %31 = arith.mulf %30, %27 : vector<8x1xf32>
    %32 = arith.addf %29, %31 : vector<8x1xf32>
    %cst_15 = arith.constant 0.000000e+00 : f32
    %33 = vector.broadcast %cst_15 : f32 to vector<8x1xf32>
    %34 = arith.cmpf oeq, %19, %33 : vector<8x1xf32>
    %cst_16 = arith.constant 0.000000e+00 : f32
    %35 = vector.broadcast %cst_16 : f32 to vector<8x1xf32>
    %36 = arith.cmpf oeq, %21, %35 : vector<8x1xf32>
    %37 = arith.andi %34, %36 : vector<8x1xi1>
    %cst_17 = arith.constant 0.000000e+00 : f32
    %38 = vector.broadcast %cst_17 : f32 to vector<8x1xf32>
    %39 = arith.select %37, %38, %32 : vector<8x1xi1>, vector<8x1xf32>
    %c0_18 = arith.constant 0 : index
    %c0_19 = arith.constant 0 : index
    %40 = vector.load %arg5[%c0_18, %c0_19] : memref<8x1xf32, #tpu.memory_space<vmem>>, vector<8x1xf32>
    tpu.vector_store %arg5[%c0_18, %c0_19], %39 {strides = array<i32>} : memref<8x1xf32, #tpu.memory_space<vmem>>, vector<8x1xf32>,
    return
  }
  func.func @transform_0(%arg0: i32, %arg1: i32) -> (i32, i32) {
    %c0_i32 = arith.constant 0 : i32
    return %arg0, %arg1 : i32, i32
  }
  func.func @transform_1(%arg0: i32, %arg1: i32) -> (i32, i32) {
    %c0_i32 = arith.constant 0 : i32
    return %arg0, %arg1 : i32, i32
  }
  func.func @transform_2(%arg0: i32, %arg1: i32) -> (i32, i32) {
    %c0_i32 = arith.constant 0 : i32
    return %arg0, %arg1 : i32, i32
  }
  func.func @transform_3(%arg0: i32, %arg1: i32) -> (i32, i32) {
    %c0_i32 = arith.constant 0 : i32
    %c0_i32_0 = arith.constant 0 : i32
    return %arg0, %c0_i32 : i32, i32
  }
}

</mosaic_0001>

<llo_original>
// kernel: tpu_custom_call.1
$region0: #{tpu_custom_call.1}
  #allocation0 [shape = 'u32[]', space=smem, size = 0x4, offset = 0x4, fixed_abs, tag = 'smem constant byte address 0x4 - core index']
  #allocation1 [shape = 'u32[144,128]{1,0:T(1,128)}', space=vmem, size = 0x12000, scoped, tag = 'internal scratch']
  %s0 = inlined_call_operand.hbm [shape: f32[8,256], index: 0, kind: input, shape index: {}]
  %s1 = inlined_call_operand.hbm [shape: f32[8,256], index: 1, kind: input, shape index: {}]
  %s2 = inlined_call_operand.hbm [shape: f32[8,256], index: 2, kind: input, shape index: {}]
  %s3 = inlined_call_operand.vmem [shape: f32[8,1], index: 3, kind: output, shape index: {}]
  %s4 = sld [smem:[#allocation0]]
  $region34: #{tpu_custom_call.1} parent=0
    _
  %s6 = ssub.s32 1, %s4
  %s7 = scalar_select 0, %s6, %s4
  $region1: #{tpu_custom_call.1} parent=0
    #allocation2 [shape = 'u8[8192]{0}', space=vmem, size = 0x2000, scoped, tag = 'input window, operand 0, single buffered']
    #allocation3 [shape = 's32[1]{0}', space=sflag, size = 0x4, scoped, tag = 'scoped memory for tpu_custom_call.1']
    #allocation4 [shape = 'u8[8192]{0}', space=vmem, size = 0x2000, scoped, tag = 'input window, operand 1, single buffered']
    #allocation5 [shape = 's32[1]{0}', space=sflag, size = 0x4, scoped, tag = 'scoped memory for tpu_custom_call.1']
    #allocation6 [shape = 'u8[8192]{0}', space=vmem, size = 0x2000, scoped, tag = 'input window, operand 2, single buffered']
    %8 = vsyncpa [#allocation3], 0
    %9 = vsyncpa [#allocation5], 0
    // Predicated region
    $region2: #{tpu_custom_call.1} parent=1 // pred_check
      _
    $region3: #{tpu_custom_call.1} parent=1 // pred_check_branch
      %11 = sbr.rel (0) target = $region5
    $region4: #{tpu_custom_call.1} parent=1 // pred_region
      %s13 = ssub.s32 256, 256
      %14 = vsyncadd [#allocation3], %s13
      %s16 = sshll.u32 [#allocation2], 4
      %s17 = int_to_ptr.vmem [resolvable:$true] %s16
      %19 = dma.hbm_to_vmem [thread:$0]  %s0, 256, %s17, [#allocation3]
    $region5: #{tpu_custom_call.1} parent=1 // pred_fallthru
      _
    // Predicated region
    $region6: #{tpu_custom_call.1} parent=1 // pred_check
      _
    $region7: #{tpu_custom_call.1} parent=1 // pred_check_branch
      %21 = sbr.rel (0) target = $region9
    $region8: #{tpu_custom_call.1} parent=1 // pred_region
      %s23 = ssub.s32 256, 256
      %24 = vsyncadd [#allocation5], %s23
      %s26 = sshll.u32 [#allocation4], 4
      %s27 = int_to_ptr.vmem [resolvable:$true] %s26
      %29 = dma.hbm_to_vmem [thread:$0]  %s1, 256, %s27, [#allocation5]
    $region9: #{tpu_custom_call.1} parent=1 // pred_fallthru
      _
    // Predicated region
    $region10: #{tpu_custom_call.1} parent=1 // pred_check
      _
    $region11: #{tpu_custom_call.1} parent=1 // pred_check_branch
      %31 = sbr.rel (0) target = $region13
    $region12: #{tpu_custom_call.1} parent=1 // pred_region
      %s33 = ssub.s32 256, 256
      %34 = vsyncadd [#allocation5], %s33
      %s36 = sshll.u32 [#allocation6], 4
      %s37 = int_to_ptr.vmem [resolvable:$true] %s36
      %39 = dma.hbm_to_vmem [thread:$0]  %s2, 256, %s37, [#allocation5]
    $region13: #{tpu_custom_call.1} parent=1 // pred_fallthru
      _
    // Predicated region
    $region14: #{tpu_custom_call.1} parent=1 // pred_check
      _
    $region15: #{tpu_custom_call.1} parent=1 // pred_check_branch
      %41 = sbr.rel (0) target = $region17
    $region16: #{tpu_custom_call.1} parent=1 // pred_region
      %42 = dma.done [#allocation3], 256
    $region17: #{tpu_custom_call.1} parent=1 // pred_fallthru
      _
    // Predicated region
    $region18: #{tpu_custom_call.1} parent=1 // pred_check
      _
    $region19: #{tpu_custom_call.1} parent=1 // pred_check_branch
      %44 = sbr.rel (0) target = $region21
    $region20: #{tpu_custom_call.1} parent=1 // pred_region
      %45 = dma.done [#allocation5], 256
    $region21: #{tpu_custom_call.1} parent=1 // pred_fallthru
      _
    // Predicated region
    $region22: #{tpu_custom_call.1} parent=1 // pred_check
      _
    $region23: #{tpu_custom_call.1} parent=1 // pred_check_branch
      %47 = sbr.rel (0) target = $region25
    $region24: #{tpu_custom_call.1} parent=1 // pred_region
      %48 = dma.done [#allocation5], 256
    $region25: #{tpu_custom_call.1} parent=1 // pred_fallthru
      _
    %v49 = vld [vmem:[#allocation2] sm:$0xff]
    %v50 = vld [vmem:[#allocation2 + $0x8] sm:$0xff]
    %v51 = vld [vmem:[#allocation4] sm:$0xff]
    %v52 = vld [vmem:[#allocation4 + $0x8] sm:$0xff]
    %v53 = vld [vmem:[#allocation6] sm:$0xff]
    %v54 = vld [vmem:[#allocation6 + $0x8] sm:$0xff]
    %v55 = vsub.f32 %v51, %v49
    %v56 = vsub.f32 %v52, %v50
    %v57 = vmul.f32 %v55, %v55
    %v58 = vmul.f32 %v56, %v56
    %v59 = vsub.f32 1.0, %v51
    %v60 = vsub.f32 1.0, %v52
    %v61 = vmul.f32 %v57, %v51
    %v62 = vmul.f32 %v58, %v52
    %v63 = vmul.f32 %v57, %v59
    %v64 = vmul.f32 %v58, %v60
    %v65 = vadd.f32 %v51, %v52
    %66 = vadd.xlane.f32.xlu0 %v65
    %v67 = vpop.xlane.xlu0 %66
    %v68 = vadd.f32 %v61, %v62
    %69 = vadd.xlane.f32.xlu0 %v68
    %v70 = vpop.xlane.xlu0 %69
    %v71 = vadd.f32 %v63, %v64
    %72 = vadd.xlane.f32.xlu0 %v71
    %v73 = vpop.xlane.xlu0 %72
    %v74 = vadd.f32 %v59, %v60
    %75 = vadd.xlane.f32.xlu0 %v74
    %v76 = vpop.xlane.xlu0 %75
    %v77 = vmax.f32 %v51, %v52
    %78 = vmax.xlane.f32.xlu0 %v77
    %v79 = vpop.xlane.xlu0 %78
    %v80 = vmax.f32 %v53, %v54
    %81 = vmax.xlane.f32.xlu0 %v80
    %v82 = vpop.xlane.xlu0 %81
    %v83 = vadd.f32 %v67, 1e-06
    %v84 = vrcp.pop %v83
    %v85 = vmul.f32 %v70, %v84
    %v86 = vadd.f32 %v76, 1e-06
    %v87 = vrcp.pop %v86
    %v88 = vmul.f32 %v73, %v87
    %v89 = vmul.f32 %v85, 0.05
    %v90 = vmul.f32 %v88, 0.95
    %v91 = vadd.f32 %v89, %v90
    %vm92 = vcmp.eq.f32.partialorder %v79, 0.0
    %vm93 = vcmp.eq.f32.partialorder %v82, 0.0
    %vm94 = vmand %vm92, %vm93
    %v95 = vsel %vm94, 0.0, %v91
    %vm96 = vcmask 7168
    %97 = vst.msk [vmem:[%s3] sm:$0xff] %vm96, %v95
    // Predicated region
    $region26: #{tpu_custom_call.1} parent=1 // pred_check
      _
    $region27: #{tpu_custom_call.1} parent=1 // pred_check_branch
      %99 = sbr.rel (0) target = $region29
    $region28: #{tpu_custom_call.1} parent=1 // pred_region
      _
    $region29: #{tpu_custom_call.1} parent=1 // pred_fallthru
      _
    // Predicated region
    $region30: #{tpu_custom_call.1} parent=1 // pred_check
      _
    $region31: #{tpu_custom_call.1} parent=1 // pred_check_branch
      %101 = sbr.rel (0) target = $region33
    $region32: #{tpu_custom_call.1} parent=1 // pred_region
      _
    $region33: #{tpu_custom_call.1} parent=1 // pred_fallthru
      _
    %102 = vsyncpa [#allocation3], 1
    %103 = vsyncpa [#allocation5], 1

</llo_original>
